<compile_context>
chip_gen: v5e
topology: v5e:2x2
jax: 0.10.0
libtpu: 0.0.40
codegen_flags: <defaults>
</compile_context>

<pallas_src>
import math
from functools import partial

import jax
import jax.numpy as jnp
from jax.experimental import pallas as pl
from jax.experimental.pallas import tpu as pltpu


# ---------------------------------------------------------------------------
# kernels
# ---------------------------------------------------------------------------
def _posenc_kernel(x_ref, enc_ref, o_ref, *, sliced_enc):
    # x: (Bt, Ft, Dt); enc: (F_pad, 1) resident (sliced) or (Ft, 1) blocked.
    ft = x_ref.shape[1]
    if sliced_enc:
        f0 = pl.multiple_of(pl.program_id(1) * ft, ft)
        enc = enc_ref[pl.ds(f0, ft), :]
    else:
        enc = enc_ref[...]
    o_ref[...] = x_ref[...] + enc[None, :, :]


def _posenc_masked_kernel(x_ref, enc_ref, mask_ref, o_ref, *, sliced_enc):
    # mask block broadcasts against (Bt, Ft, Dt): every dim is either 1 or full.
    ft = x_ref.shape[1]
    if sliced_enc:
        f0 = pl.multiple_of(pl.program_id(1) * ft, ft)
        enc = enc_ref[pl.ds(f0, ft), :]
    else:
        enc = enc_ref[...]
    o_ref[...] = x_ref[...] + enc[None, :, :] * mask_ref[...]


def _posenc_flat_kernel(x_ref, pos_ref, o_ref):
    # Lane-dense path: x (Bt, Ct); pos (1, Ct) broadcast over rows.
    o_ref[...] = x_ref[...] + pos_ref[...]


# ---------------------------------------------------------------------------
# tiling / chip helpers
# ---------------------------------------------------------------------------
_TILE_CAP_MAX = 16 * 1024 * 1024      # per-streamed-buffer tile ceiling
_VMEM_HEADROOM = 8 * 1024 * 1024      # encoding + compiler scratch + semaphores
_ENC_RESIDENT_MAX = 2 * 1024 * 1024   # max lane-padded resident encoding


def _rup(x, m):
    return (x + m - 1) // m * m


def _chip_profile():
    """Best-effort (num_tensorcores_per_device, vmem_limit_bytes)."""
    kind = ""
    try:
        kind = (getattr(jax.devices()[0], "device_kind", "") or "").lower()
    except Exception:
        pass
    kind = kind.replace(" ", "")
    if "v2" in kind or "v3" in kind:
        return 1, 12 * 1024 * 1024             # 16 MiB physical VMEM per core
    if any(t in kind for t in ("v5e", "v5lite", "v6e", "v6lite")):
        return 1, 64 * 1024 * 1024             # single TC, 128 MiB physical VMEM
    if "v4" in kind or "v5" in kind:
        return 2, 64 * 1024 * 1024             # megacore: 2 TCs, 128 MiB VMEM
    return 2, 48 * 1024 * 1024                 # v7x / unknown: 2 TCs, 64 MiB VMEM


def _vmem_budget(vmem_limit):
    return vmem_limit - min(_VMEM_HEADROOM, vmem_limit // 4)


def _tile_cap(vmem_limit, n_big):
    # n_big streamed buffers, each double-buffered by the pipeline.
    return max(256 * 1024, min(_TILE_CAP_MAX, _vmem_budget(vmem_limit) // (2 * n_big)))


def _choose_tiles_3d(B, F, D, itemsize, sub, cap, num_cores):
    """Blocks for x/out of shape (B, F, D); returns (Bt, Ft, Dt)."""
    Dt = D
    row = _rup(D, 128) * itemsize              # lane-padded bytes of one (1, D) row
    slab = _rup(F, 8) * row                    # padded bytes of one (F, D) slab
    if slab <= cap:
        Ft = F
        Bt = min(B, max(1, cap // slab))
    elif 8 * row <= cap:
        Bt = 1
        Ft = min(F, max(8, (cap // row) // sub * sub))
    else:
        # Even 8 rows of full D blow the budget: tile the lane dim as well.
        Bt, Ft = 1, min(F, 8)
        Dt = max(128, min(D, (cap // (8 * itemsize)) // 128 * 128))
    if num_cores >= 2 and pl.cdiv(B, Bt) * pl.cdiv(F, Ft) * pl.cdiv(D, Dt) < 2:
        # Keep both TensorCores busy (only forced on multi-TC chips).
        if B >= 2:
            Bt = (B + 1) // 2
        elif F >= 2 * sub:
            Ft = _rup((F + 1) // 2, sub)
    return Bt, Ft, Dt


def _choose_tiles_flat(B, FD, itemsize, sub, budget, num_cores):
    """Blocks for the lane-dense (B, F*D) view; returns (Bt, Ct)."""
    min_bt = min(B, sub)
    mb = _rup(min_bt, 8)
    # Per step (double-buffered): x tile + out tile (Bt, Ct) plus the pos row
    # (1, Ct), which the (8, 128) VMEM layout pads to 8 sublanes.
    max_ct = max(128, budget // (2 * (2 * mb + 8) * itemsize))
    Ct = FD if FD <= max_ct else max(128, min(FD, max_ct // 128 * 128))
    bt_cap = max(min_bt, (budget // (2 * Ct * itemsize) - 8) // 2)
    Bt = B if bt_cap >= B else max(sub, bt_cap // sub * sub)
    if num_cores >= 2 and pl.cdiv(B, Bt) * pl.cdiv(FD, Ct) < 2:
        if B >= 2 * sub:
            Bt = _rup((B + 1) // 2, sub)
        elif FD > 128:
            Ct = max(128, min(Ct, _rup((FD + 1) // 2, 128)))
    return Bt, Ct


def _check_broadcast(shape, full):
    if len(shape) != len(full) or any(s not in (1, f) for s, f in zip(shape, full)):
        raise ValueError(
            f"mask of shape {tuple(shape)} is not broadcastable against {tuple(full)}")


# ---------------------------------------------------------------------------
# public wrapper
# ---------------------------------------------------------------------------
def annas_positional_encoding(x, fix_encoding_param, mask=None, *, donate_x=False):
    """out = x + fix_encoding.expand(F, D) [* mask], broadcast over batch.

    x:                  [B, F, D]
    fix_encoding_param: [F, 1] (or [F]) learned per-fixation offset
    mask:               None, or broadcastable against the (F, D) encoding /
                        the (B, F, D) input (scalar, (D,), (F,1), (1,D), (F,D),
                        (B,F,D), ...), as in the torch module.
    donate_x:           alias the output onto x's HBM buffer.
    """
    B, F, D = x.shape
    dtype = x.dtype
    itemsize = jnp.dtype(dtype).itemsize
    sub = max(8, 32 // itemsize)            # sublane packing: 8 f32 / 16 bf16 / 32 int8
    num_cores, vmem_limit = _chip_profile()
    io_alias = {0: 0} if donate_x else {}

    enc = jnp.asarray(fix_encoding_param, dtype).reshape(F, 1)

    # ---- classify the mask (never materialize it to (F, D) in HBM) ---------
    mask3 = None                            # streamed mask, rank-3 (Bm, Fm, Dm)
    if mask is not None:
        m = jnp.asarray(mask, dtype)
        while m.ndim > 2 and m.shape[0] == 1:
            m = m.reshape(m.shape[1:])
        if m.ndim > 3:
            raise ValueError(f"mask of rank {m.ndim} is not supported")
        if m.ndim <= 2:
            fm, dm = ((1, 1) if m.ndim == 0 else
                      (1, m.shape[0]) if m.ndim == 1 else tuple(m.shape))
            _check_broadcast((fm, dm), (F, D))
            if dm == 1:
                enc = enc * m.reshape(fm, 1)     # fold low-rank masks into enc
            else:
                mask3 = m.reshape(1, fm, dm)
        else:
            _check_broadcast(m.shape, (B, F, D))
            mask3 = m

    # ---- lane-dense path when D is not a multiple of 128 -------------------
    if D % 128 != 0 and (mask3 is None or mask3.shape[0] == 1):
        FD = F * D
        pos = enc if mask3 is None else enc * mask3[0]
        pos = jnp.broadcast_to(pos, (F, D)).reshape(1, FD)   # tiny precompute
        x2 = x.reshape(B, FD)                                # free (bitcast) reshape
        Bt, Ct = _choose_tiles_flat(B, FD, itemsize, sub,
                                    _vmem_budget(vmem_limit), num_cores)
        grid = (pl.cdiv(B, Bt), pl.cdiv(FD, Ct))
        out2 = pl.pallas_call(
            _posenc_flat_kernel,
            out_shape=jax.ShapeDtypeStruct((B, FD), dtype),
            grid=grid,
            in_specs=[pl.BlockSpec((Bt, Ct), lambda b, c: (b, c)),
                      pl.BlockSpec((1, Ct), lambda b, c: (0, c))],
            out_specs=pl.BlockSpec((Bt, Ct), lambda b, c: (b, c)),
            compiler_params=pltpu.CompilerParams(
                dimension_semantics=("parallel", "parallel"),
                vmem_limit_bytes=vmem_limit),
            input_output_aliases=io_alias,
        )(x2, pos)
        return out2.reshape(B, F, D)
    # (per-batch masks with D % 128 != 0 take the 3-D path below: correct, just
    #  lane-masked stores on the trailing partial vreg.)

    # ---- main 3-D path ------------------------------------------------------
    n_big = 2 if mask3 is None else 3
    cap = _tile_cap(vmem_limit, n_big)
    Bt, Ft, Dt = _choose_tiles_3d(B, F, D, itemsize, sub, cap, num_cores)
    grid = (pl.cdiv(B, Bt), pl.cdiv(F, Ft), pl.cdiv(D, Dt))

    # Keep the (F, 1) encoding resident in VMEM (constant index_map + in-kernel
    # pl.ds slice) unless its lane-padded footprint would be large.
    nf = grid[1]
    resident = (nf == 1) or (_rup(F, 8) * 128 * itemsize <= _ENC_RESIDENT_MAX)
    if resident:
        f_pad = nf * Ft
        if f_pad != F:
            enc = jnp.pad(enc, ((0, f_pad - F), (0, 0)))
        enc_spec = pl.BlockSpec((f_pad, 1), lambda b, f, d: (0, 0))
    else:
        enc_spec = pl.BlockSpec((Ft, 1), lambda b, f, d: (f, 0))

    x_spec = pl.BlockSpec((Bt, Ft, Dt), lambda b, f, d: (b, f, d))
    out_spec = pl.BlockSpec((Bt, Ft, Dt), lambda b, f, d: (b, f, d))
    cp = pltpu.CompilerParams(
        dimension_semantics=("parallel", "parallel", "parallel"),
        vmem_limit_bytes=vmem_limit)
    out_shape = jax.ShapeDtypeStruct((B, F, D), dtype)

    if mask3 is None:
        return pl.pallas_call(
            partial(_posenc_kernel, sliced_enc=resident),
            out_shape=out_shape, grid=grid,
            in_specs=[x_spec, enc_spec], out_specs=out_spec,
            compiler_params=cp, input_output_aliases=io_alias,
        )(x, enc)

    bm, fm, dm = mask3.shape
    mask_block = (Bt if bm == B else 1, Ft if fm == F else 1, Dt if dm == D else 1)
    sel = (bm == B, fm == F, dm == D)
    mask_spec = pl.BlockSpec(
        mask_block,
        lambda b, f, d, s=sel: (b if s[0] else 0, f if s[1] else 0, d if s[2] else 0))
    return pl.pallas_call(
        partial(_posenc_masked_kernel, sliced_enc=resident),
        out_shape=out_shape, grid=grid,
        in_specs=[x_spec, enc_spec, mask_spec], out_specs=out_spec,
        compiler_params=cp, input_output_aliases=io_alias,
    )(x, enc, mask3)


def init_fix_encoding(key, fixations):
    # Deterministic xavier_uniform_ for a (fixations, 1) parameter:
    # bound = sqrt(6 / (fan_in + fan_out)) with fan_in=1, fan_out=fixations.
    bound = math.sqrt(6.0 / (fixations + 1))
    return jax.random.uniform(
        key, (fixations, 1), dtype=jnp.float32, minval=-bound, maxval=bound)


if __name__ == "__main__":
    key = jax.random.PRNGKey(0)
    k_param, k_x, k_m, k_mb, k_x2 = jax.random.split(key, 5)

    B, F, D = 2, 8, 128  # batch, fixations, features
    fix_encoding = init_fix_encoding(k_param, F)
    x = jax.random.normal(k_x, (B, F, D), dtype=jnp.float32)
    enc_full = jnp.broadcast_to(fix_encoding, (F, D))

    # 1) no mask
    out = jax.block_until_ready(annas_positional_encoding(x, fix_encoding))
    assert jnp.allclose(out, x + enc_full[None], atol=1e-6), "no-mask mismatch"

    # 2) full (F, D) mask
    mask_fd = (jax.random.uniform(k_m, (F, D)) > 0.5).astype(jnp.float32)
    out = jax.block_until_ready(annas_positional_encoding(x, fix_encoding, mask_fd))
    assert jnp.allclose(out, x + (enc_full * mask_fd)[None], atol=1e-6), "(F,D) mask mismatch"

    # 3) low-rank (F, 1) mask — folded into the encoding, no (F, D) materialization
    mask_f1 = (jax.random.uniform(k_m, (F, 1)) > 0.5).astype(jnp.float32)
    out = jax.block_until_ready(annas_positional_encoding(x, fix_encoding, mask_f1))
    assert jnp.allclose(out, x + (enc_full * mask_f1)[None], atol=1e-6), "(F,1) mask mismatch"

    # 4) per-batch (B, F, D) mask
    mask_bfd = (jax.random.uniform(k_mb, (B, F, D)) > 0.5).astype(jnp.float32)
    out = jax.block_until_ready(annas_positional_encoding(x, fix_encoding, mask_bfd))
    assert jnp.allclose(out, x + enc_full[None] * mask_bfd, atol=1e-6), "(B,F,D) mask mismatch"

    # 5) D not a multiple of 128 -> lane-dense flattened path
    D2 = 96
    x2 = jax.random.normal(k_x2, (B, F, D2), dtype=jnp.float32)
    out = jax.block_until_ready(annas_positional_encoding(x2, fix_encoding))
    assert jnp.allclose(out, x2 + jnp.broadcast_to(fix_encoding, (F, D2))[None],
                        atol=1e-6), "flattened-path mismatch"

    print("KERNEL_OK")
</pallas_src>

<mosaic_0001>
module attributes {stable_mosaic.version = 11 : i64} {
  func.func @_posenc_kernel(%arg0: i32, %arg1: i32, %arg2: i32, %arg3: memref<1x8x128xf32, #tpu.memory_space<vmem>>, %arg4: memref<8x1xf32, #tpu.memory_space<vmem>>, %arg5: memref<1x8x128xf32, #tpu.memory_space<vmem>>) attributes {dimension_semantics = [#tpu.dimension_semantics<parallel>, #tpu.dimension_semantics<parallel>, #tpu.dimension_semantics<parallel>], iteration_bounds = array<i64: 2, 1, 1>, scalar_prefetch = 0 : i64, scratch_operands = 0 : i64, tpu.core_type = #tpu.core_type<tc>, window_params = [{transform_indices = @transform_0, window_bounds = array<i64: 1, 8, 128>}, {pipeline_mode = #tpu.pipeline_mode<synchronous>, transform_indices = @transform_1, window_bounds = array<i64: 8, 1>}, {transform_indices = @transform_2, window_bounds = array<i64: 1, 8, 128>}]} {
    %c8_i32 = arith.constant 8 : i32
    %0 = arith.muli %arg1, %c8_i32 : i32
    %1 = tpu.assume_multiple %0, 8 : i32
    %2 = arith.index_cast %1 : i32 to index
    %c0 = arith.constant 0 : index
    %3 = vector.load %arg4[%2, %c0] : memref<8x1xf32, #tpu.memory_space<vmem>>, vector<8x1xf32>
    %c0_0 = arith.constant 0 : index
    %c0_1 = arith.constant 0 : index
    %c0_2 = arith.constant 0 : index
    %4 = vector.load %arg3[%c0_0, %c0_1, %c0_2] : memref<1x8x128xf32, #tpu.memory_space<vmem>>, vector<1x8x128xf32>
    %5 = vector.shape_cast %3 : vector<8x1xf32> to vector<1x8x1xf32>
    %6 = vector.broadcast %5 : vector<1x8x1xf32> to vector<1x8x128xf32>
    %7 = arith.addf %4, %6 : vector<1x8x128xf32>
    %c0_3 = arith.constant 0 : index
    %c0_4 = arith.constant 0 : index
    %c0_5 = arith.constant 0 : index
    %8 = vector.load %arg5[%c0_3, %c0_4, %c0_5] : memref<1x8x128xf32, #tpu.memory_space<vmem>>, vector<1x8x128xf32>
    tpu.vector_store %arg5[%c0_3, %c0_4, %c0_5], %7 {strides = array<i32>} : memref<1x8x128xf32, #tpu.memory_space<vmem>>, vector<1x8x128xf32>,
    return
  }
  func.func @transform_0(%arg0: i32, %arg1: i32, %arg2: i32) -> (i32, i32, i32) {
    %c0_i32 = arith.constant 0 : i32
    return %arg0, %arg1, %arg2 : i32, i32, i32
  }
  func.func @transform_1(%arg0: i32, %arg1: i32, %arg2: i32) -> (i32, i32) {
    %c0_i32 = arith.constant 0 : i32
    %c0_i32_0 = arith.constant 0 : i32
    %c0_i32_1 = arith.constant 0 : i32
    return %c0_i32, %c0_i32_0 : i32, i32
  }
  func.func @transform_2(%arg0: i32, %arg1: i32, %arg2: i32) -> (i32, i32, i32) {
    %c0_i32 = arith.constant 0 : i32
    return %arg0, %arg1, %arg2 : i32, i32, i32
  }
}

</mosaic_0001>

<llo_original>
// kernel: tpu_custom_call.1
$region0: #{tpu_custom_call.1}
  #allocation0 [shape = 'u32[]', space=smem, size = 0x4, offset = 0x4, fixed_abs, tag = 'smem constant byte address 0x4 - core index']
  #allocation1 [shape = 'u32[72,128]{1,0:T(1,128)}', space=vmem, size = 0x9000, scoped, tag = 'internal scratch']
  %s0 = inlined_call_operand.hbm [shape: f32[2,8,128], index: 0, kind: input, shape index: {}]
  %s1 = inlined_call_operand.vmem [shape: f32[8,1], index: 1, kind: input, shape index: {}]
  %s2 = inlined_call_operand.hbm [shape: f32[2,8,128], index: 2, kind: output, shape index: {}]
  %s3 = sld [smem:[#allocation0]]
  $region45: #{tpu_custom_call.1} parent=0
    _
  %s5 = ssub.s32 1, %s3
  %s6 = scalar_select 0, %s5, %s3
  $region1: #{tpu_custom_call.1} parent=0
    #allocation2 [shape = 'u8[8192]{0}', space=vmem, size = 0x2000, scoped, tag = 'input window, operand 0']
    #allocation3 [shape = 's32[2]{0}', space=sflag, size = 0x8, scoped, tag = 'scoped memory for tpu_custom_call.1']
    #allocation4 [shape = 's32[2]{0}', space=sflag, size = 0x8, scoped, tag = 'scoped memory for tpu_custom_call.1']
    #allocation5 [shape = 'u8[8192]{0}', space=vmem, size = 0x2000, scoped, tag = 'output window, operand 0']
    %7 = vsyncpa [#allocation3], 0
    %s8 = scalar_lea.sflag [#allocation3], 1
    %9 = vsyncpa %s8, 0
    %10 = vsyncpa [#allocation4], 0
    %s11 = scalar_lea.sflag [#allocation4], 1
    %12 = vsyncpa %s11, 0
    loop: start=0, step=1, limit=4
    $region2: #{tpu_custom_call.1} parent=1 // loop_pre_header
      _
    $region3: #{tpu_custom_call.1} parent=1 // loop_header
      %s14 = sphi 0, %s18
      %p15 = scmp.ge.s32.totalorder %s14, 4
      %s21 = sphi 0, %s40
      %s22 = sphi 0, %s36
      %s23 = sphi 0, %s32
      %s24 = sphi 0, %s21
      %s25 = sphi 0, %s22
      %s26 = sphi 0, %s23
      %s27 = sphi 0, %s24
      %s28 = sphi 0, %s25
      %s29 = sphi 0, %s26
      %s47 = sphi 0, %s49
      %s50 = sphi 0, %s47
      %s51 = sphi 0, %s50
      %s67 = sphi 0, %s51
      %s71 = sphi 0, %s71
      %s73 = sphi 0, %s71
      %s74 = sphi 0, %s73
      %s88 = sphi 0, %s74
      %s98 = sphi 0, %s100
      %s101 = sphi 0, %s98
      %s102 = sphi 0, %s101
      %s118 = sphi 0, %s102
    $region4: #{tpu_custom_call.1} parent=1 // loop_header_branch
      %17 = sbr.rel (%p15) target = $region8
    $region5: #{tpu_custom_call.1} parent=1 // loop_body
      %s19 = ssub.s32 %s14, 1
      %s20 = ssub.s32 %s14, 2
      %s30 = sadd.s32 1, %s23
      %p31 = scmp.ge.s32.totalorder %s30, 1
      %s32 = scalar_select %p31, 0, %s30
      %s33 = sadd.s32 1, %s22
      %s34 = scalar_select %p31, %s33, %s22
      %p35 = scmp.ge.s32.totalorder %s34, 1
      %s36 = scalar_select %p35, 0, %s34
      %s37 = sadd.s32 1, %s21
      %s38 = scalar_select %p35, %s37, %s21
      %p39 = scmp.ge.s32.totalorder %s38, 2
      %s40 = scalar_select %p39, 0, %s38
      %s41 = ssub.s32 %s21, %s40
      %s42 = ssub.s32 %s22, %s36
      %s43 = sor.u32 %s41, %s42
      %s44 = ssub.s32 %s23, %s32
      %s45 = sor.u32 %s43, %s44
      %p46 = scmp.eq.s32.totalorder %s45, 0
      %s48 = sadd.s32 %s47, 1
      %s49 = scalar_select %p46, %s47, %s48
      %p52 = pneg %p46
      %p53 = scmp.eq.s32.totalorder %s14, 1
      %p54 = por %p52, %p53
      %p55 = scmp.ne.s32.totalorder %s47, %s50
      %p56 = scmp.eq.s32.totalorder %s14, 0
      %p57 = por %p55, %p56
      %p58 = scmp.ne.s32.totalorder %s47, %s50
      %p59 = scmp.eq.s32.totalorder %s19, 1
      %p60 = por %p58, %p59
      %p61 = scmp.ne.s32.totalorder %s50, %s51
      %p62 = scmp.eq.s32.totalorder %s19, 0
      %p63 = por %p61, %p62
      %p64 = scmp.ne.s32.totalorder %s50, %s51
      %p65 = scmp.eq.s32.totalorder %s20, 1
      %p66 = por %p64, %p65
      %p68 = scmp.ne.s32.totalorder %s51, %s67
      %p69 = scmp.eq.s32.totalorder %s20, 0
      %p70 = por %p68, %p69
      %s72 = sadd.s32 %s71, 1
      %p75 = scmp.eq.s32.totalorder %s14, 1
      %p76 = scmp.ne.s32.totalorder %s71, %s73
      %p77 = scmp.eq.s32.totalorder %s14, 0
      %p78 = por %p76, %p77
      %p79 = scmp.ne.s32.totalorder %s71, %s73
      %p80 = scmp.eq.s32.totalorder %s19, 1
      %p81 = por %p79, %p80
      %p82 = scmp.ne.s32.totalorder %s73, %s74
      %p83 = scmp.eq.s32.totalorder %s19, 0
      %p84 = por %p82, %p83
      %p85 = scmp.ne.s32.totalorder %s73, %s74
      %p86 = scmp.eq.s32.totalorder %s20, 1
      %p87 = por %p85, %p86
      %p89 = scmp.ne.s32.totalorder %s74, %s88
      %p90 = scmp.eq.s32.totalorder %s20, 0
      %p91 = por %p89, %p90
      %s92 = ssub.s32 %s21, %s40
      %s93 = ssub.s32 %s22, %s36
      %s94 = sor.u32 %s92, %s93
      %s95 = ssub.s32 %s23, %s32
      %s96 = sor.u32 %s94, %s95
      %p97 = scmp.eq.s32.totalorder %s96, 0
      %s99 = sadd.s32 %s98, 1
      %s100 = scalar_select %p97, %s98, %s99
      %p103 = pneg %p97
      %p104 = scmp.eq.s32.totalorder %s14, 1
      %p105 = por %p103, %p104
      %p106 = scmp.ne.s32.totalorder %s98, %s101
      %p107 = scmp.eq.s32.totalorder %s14, 0
      %p108 = por %p106, %p107
      %p109 = scmp.ne.s32.totalorder %s98, %s101
      %p110 = scmp.eq.s32.totalorder %s19, 1
      %p111 = por %p109, %p110
      %p112 = scmp.ne.s32.totalorder %s101, %s102
      %p113 = scmp.eq.s32.totalorder %s19, 0
      %p114 = por %p112, %p113
      %p115 = scmp.ne.s32.totalorder %s101, %s102
      %p116 = scmp.eq.s32.totalorder %s20, 1
      %p117 = por %p115, %p116
      %p119 = scmp.ne.s32.totalorder %s102, %s118
      %p120 = scmp.eq.s32.totalorder %s20, 0
      %p121 = por %p119, %p120
      %p122 = scmp.le.s32.totalorder 1, %s14
      %p123 = scmp.lt.s32.totalorder %s14, 3
      %p124 = pnand %p122, %p123
      %p125 = pneg %p124
      // Predicated region
      $region9: #{tpu_custom_call.1} parent=5 // pred_check
        _
      $region10: #{tpu_custom_call.1} parent=5 // pred_check_branch
        %127 = sbr.rel (%p124) target = $region12
      $region11: #{tpu_custom_call.1} parent=5 // pred_region
        %s128 = ssub.s32 %s14, 1
        // Predicated region
        $region13: #{tpu_custom_call.1} parent=11 // pred_check
          %p129 = pneg %p84
        $region14: #{tpu_custom_call.1} parent=11 // pred_check_branch
          %131 = sbr.rel (%p129) target = $region16
        $region15: #{tpu_custom_call.1} parent=11 // pred_region
          _
        $region16: #{tpu_custom_call.1} parent=11 // pred_fallthru
          _
      $region12: #{tpu_custom_call.1} parent=5 // pred_fallthru
        _
      %p132 = scmp.lt.s32.totalorder %s14, 2
      // Predicated region
      $region17: #{tpu_custom_call.1} parent=5 // pred_check
        %p133 = pneg %p132
      $region18: #{tpu_custom_call.1} parent=5 // pred_check_branch
        %135 = sbr.rel (%p133) target = $region20
      $region19: #{tpu_custom_call.1} parent=5 // pred_region
        // Predicated region
        $region21: #{tpu_custom_call.1} parent=19 // pred_check
          %p136 = pneg %p57
        $region22: #{tpu_custom_call.1} parent=19 // pred_check_branch
          %138 = sbr.rel (%p136) target = $region24
        $region23: #{tpu_custom_call.1} parent=19 // pred_region
          %s139 = sand.u32 %s47, 1
          %s140 = scalar_lea.sflag [#allocation3], %s139
          %s141 = sand.u32 %s47, 1
          %s142 = smul.addr %s141, 8
          %s143 = scalar_lea.vmem [#allocation2], %s142
          %145 = vsyncadd %s140, 0
          %s146 = sadd.s32 %s23, %s22
          %s147 = sadd.s32 %s146, %s21
          %s148 = smul.addr %s147, 8
          %s149 = scalar_lea.hbm %s0, %s148
          %s151 = sshll.u32 %s149, 4
          %s152 = int_to_ptr.hbm [resolvable:$true] %s151
          %s153 = sshll.u32 %s143, 4
          %s154 = int_to_ptr.vmem [resolvable:$true] %s153
          %156 = dma.hbm_to_vmem [thread:$0]  %s152, 128, %s154, %s140
        $region24: #{tpu_custom_call.1} parent=19 // pred_fallthru
          _
      $region20: #{tpu_custom_call.1} parent=5 // pred_fallthru
        _
      %p157 = scmp.le.s32.totalorder 1, %s14
      %p158 = scmp.lt.s32.totalorder %s14, 3
      %p159 = pnand %p157, %p158
      %p160 = pneg %p159
      // Predicated region
      $region25: #{tpu_custom_call.1} parent=5 // pred_check
        _
      $region26: #{tpu_custom_call.1} parent=5 // pred_check_branch
        %162 = sbr.rel (%p159) target = $region28
      $region27: #{tpu_custom_call.1} parent=5 // pred_region
        %s163 = ssub.s32 %s14, 1
        %s164 = sand.u32 %s50, 1
        %s165 = scalar_lea.sflag [#allocation3], %s164
        %s166 = sand.u32 %s50, 1
        %s167 = smul.addr %s166, 8
        %s168 = scalar_lea.vmem [#allocation2], %s167
        // Predicated region
        $region29: #{tpu_custom_call.1} parent=27 // pred_check
          %p169 = pneg %p63
        $region30: #{tpu_custom_call.1} parent=27 // pred_check_branch
          %171 = sbr.rel (%p169) target = $region32
        $region31: #{tpu_custom_call.1} parent=27 // pred_region
          %173 = dma.done %s165, 128
        $region32: #{tpu_custom_call.1} parent=27 // pred_fallthru
          _
        %s174 = sand.u32 %s50, 1
        %s175 = scalar_lea.sflag [#allocation3], %s174
        %s176 = sand.u32 %s50, 1
        %s177 = smul.addr %s176, 8
        %s178 = scalar_lea.vmem [#allocation2], %s177
        %p179 = pneg %p63
        %p180 = pneg %p60
        %p181 = pneg %p84
        %p182 = pneg %p81
        %p183 = pneg %p114
        %p184 = pneg %p111
        %s185 = sand.u32 %s101, 1
        %s186 = scalar_lea.sflag [#allocation4], %s185
        %s187 = sand.u32 %s101, 1
        %s188 = smul.addr %s187, 8
        %s189 = scalar_lea.vmem [#allocation5], %s188
        %s190 = smul.u32 %s25, 8
        %s191 = scalar_lea.vmem %s1, %s190
        %v192 = vld [vmem:[%s191] sm:$0xff]
        %v193 = vld [vmem:[%s168] sm:$0xff]
        %195 = vset.pattern.permute.xlu0 0
        %196 = vperm.xlu0 %195, %v192
        %v197 = vpop.permute.xlu0 %196
        %v199 = vadd.f32 %v193, %v197
        %200 = vst [vmem:[%s189] sm:$0xff] %v199
        %s201 = sand.u32 %s101, 1
        %s202 = scalar_lea.sflag [#allocation4], %s201
        %s203 = sand.u32 %s101, 1
        %s204 = smul.addr %s203, 8
        %s205 = scalar_lea.vmem [#allocation5], %s204
        // Predicated region
        $region33: #{tpu_custom_call.1} parent=27 // pred_check
          %p206 = pneg %p111
        $region34: #{tpu_custom_call.1} parent=27 // pred_check_branch
          %208 = sbr.rel (%p206) target = $region36
        $region35: #{tpu_custom_call.1} parent=27 // pred_region
          %210 = vsyncadd %s202, 0
          %s211 = sadd.s32 %s26, %s25
          %s212 = sadd.s32 %s211, %s24
          %s213 = smul.addr %s212, 8
          %s214 = scalar_lea.hbm %s2, %s213
          %s216 = sshll.u32 %s205, 4
          %s217 = int_to_ptr.vmem [resolvable:$true] %s216
          %s218 = sshll.u32 %s214, 4
          %s219 = int_to_ptr.hbm [resolvable:$true] %s218
          %221 = dma.vmem_to_hbm [thread:$0]  %s217, 128, %s219, %s202
        $region36: #{tpu_custom_call.1} parent=27 // pred_fallthru
          _
      $region28: #{tpu_custom_call.1} parent=5 // pred_fallthru
        _
      %p222 = scmp.le.s32.totalorder 2, %s14
      // Predicated region
      $region37: #{tpu_custom_call.1} parent=5 // pred_check
        %p223 = pneg %p222
      $region38: #{tpu_custom_call.1} parent=5 // pred_check_branch
        %225 = sbr.rel (%p223) target = $region40
      $region39: #{tpu_custom_call.1} parent=5 // pred_region
        %s226 = ssub.s32 %s14, 2
        // Predicated region
        $region41: #{tpu_custom_call.1} parent=39 // pred_check
          %p227 = pneg %p117
        $region42: #{tpu_custom_call.1} parent=39 // pred_check_branch
          %229 = sbr.rel (%p227) target = $region44
        $region43: #{tpu_custom_call.1} parent=39 // pred_region
          %s230 = sand.u32 %s102, 1
          %s231 = scalar_lea.sflag [#allocation4], %s230
          %s232 = sand.u32 %s102, 1
          %s233 = smul.addr %s232, 8
          %s234 = scalar_lea.vmem [#allocation5], %s233
          %236 = dma.done %s231, 128
        $region44: #{tpu_custom_call.1} parent=39 // pred_fallthru
          _
      $region40: #{tpu_custom_call.1} parent=5 // pred_fallthru
        _
    $region6: #{tpu_custom_call.1} parent=1 // loop_footer
      %s18 = sadd.s32 1, %s14
    $region7: #{tpu_custom_call.1} parent=1 // loop_footer_branch
      %13 = sbr.rel target = $region3
    $region8: #{tpu_custom_call.1} parent=1 // loop_exit
      _
    %237 = vsyncpa [#allocation3], 1
    %s238 = scalar_lea.sflag [#allocation3], 1
    %239 = vsyncpa %s238, 1
    %240 = vsyncpa [#allocation4], 1
    %s241 = scalar_lea.sflag [#allocation4], 1
    %242 = vsyncpa %s241, 1

</llo_original>
